<compile_context>
chip_gen: v6e
topology: v6e:2x2x1
jax: 0.10.0
libtpu: 0.0.40
codegen_flags: <defaults>
</compile_context>

<pallas_src>
import jax
import jax.numpy as jnp
from jax.experimental import pallas as pl
from jax.experimental.pallas import tpu as pltpu


def rnn_agent_rollout_kernel(
    x_ref,                      # (B, D)  input at timestep t (time dim squeezed)
    h0_ref,                     # (B, H)  initial hidden state (read at t == 0)
    w1_ref, b1_ref,             # fc1: (D, H), (1, H)
    wi_ref, bi_ref,             # GRU input->gates  [r|z|n]: (H, 3H), (1, 3H)
    wh_ref, bh_ref,             # GRU hidden->gates [r|z|n]: (H, 3H), (1, 3H)
    w2_ref, b2_ref,             # fc2 (lane-padded): (H, A_pad), (1, A_pad)
    q_ref,                      # (B, A_pad) output at timestep t
    hout_ref,                   # (B, H) final hidden state
    h_scratch,                  # VMEM (B, H) f32 hidden-state carry
):
    t = pl.program_id(0)

    @pl.when(t == 0)
    def _():
        h_scratch[...] = h0_ref[...]

    h = h_scratch[...]
    x = x_ref[...]
    H = h.shape[-1]

    # fc1 + relu  (MXU matmul, f32 accumulate, VPU relu)
    xh = jnp.dot(x.astype(w1_ref.dtype), w1_ref[...],
                 preferred_element_type=jnp.float32) + b1_ref[...]
    xh = jnp.maximum(xh, 0.0)

    # GRUCell (PyTorch semantics), fused gate matmuls:
    #   gi = xh @ [Wir|Wiz|Win] + [bir|biz|bin]
    #   gh = h  @ [Whr|Whz|Whn] + [bhr|bhz|bhn]
    gi = jnp.dot(xh.astype(wi_ref.dtype), wi_ref[...],
                 preferred_element_type=jnp.float32) + bi_ref[...]
    gh = jnp.dot(h.astype(wh_ref.dtype), wh_ref[...],
                 preferred_element_type=jnp.float32) + bh_ref[...]

    r = jax.nn.sigmoid(gi[:, 0 * H:1 * H] + gh[:, 0 * H:1 * H])
    z = jax.nn.sigmoid(gi[:, 1 * H:2 * H] + gh[:, 1 * H:2 * H])
    n = jnp.tanh(gi[:, 2 * H:3 * H] + r * gh[:, 2 * H:3 * H])
    h_new = (1.0 - z) * n + z * h

    # fc2 (lane-dense: A padded to a multiple of 128 in the wrapper)
    q = jnp.dot(h_new.astype(w2_ref.dtype), w2_ref[...],
                preferred_element_type=jnp.float32) + b2_ref[...]

    q_ref[...] = q
    h_scratch[...] = h_new

    @pl.when(t == pl.num_programs(0) - 1)
    def _():
        hout_ref[...] = h_new


def rnn_agent_rollout(xs, h0, params):
    """T-step rollout in a single pallas_call.

    xs: (T, B, input_shape) f32
    h0: (B, H) f32
    returns: q_seq (T, B, n_actions) f32, h_final (B, H) f32
    """
    T, B, D = xs.shape
    H = params["w1"].shape[1]
    A = params["w2"].shape[1]
    A_pad = ((A + 127) // 128) * 128   # lane-dense output slab width

    # Zero-pad fc2 along the action (lane) axis so the kernel's q store is
    # an unmasked, 128-lane-dense store; wrapper slices the pad away.
    w2p = jnp.zeros((H, A_pad), params["w2"].dtype).at[:, :A].set(params["w2"])
    b2p = jnp.zeros((1, A_pad), jnp.float32).at[:, :A].set(params["b2"])

    grid_spec = pltpu.PrefetchScalarGridSpec(
        num_scalar_prefetch=0,
        grid=(T,),
        in_specs=[
            # Per-timestep input: new (B, D) block each grid step.
            pl.BlockSpec((None, B, D), lambda t: (t, 0, 0)),
            # Everything else is VMEM-resident across the whole rollout.
            pl.BlockSpec((B, H), lambda t: (0, 0)),            # h0
            pl.BlockSpec((D, H), lambda t: (0, 0)),            # w1
            pl.BlockSpec((1, H), lambda t: (0, 0)),            # b1
            pl.BlockSpec((H, 3 * H), lambda t: (0, 0)),        # wi
            pl.BlockSpec((1, 3 * H), lambda t: (0, 0)),        # bi
            pl.BlockSpec((H, 3 * H), lambda t: (0, 0)),        # wh
            pl.BlockSpec((1, 3 * H), lambda t: (0, 0)),        # bh
            pl.BlockSpec((H, A_pad), lambda t: (0, 0)),        # w2 (padded)
            pl.BlockSpec((1, A_pad), lambda t: (0, 0)),        # b2 (padded)
        ],
        out_specs=(
            pl.BlockSpec((None, B, A_pad), lambda t: (t, 0, 0)),  # q per step
            pl.BlockSpec((B, H), lambda t: (0, 0)),               # final h
        ),
        scratch_shapes=[pltpu.VMEM((B, H), jnp.float32)],          # h carry
    )

    q_pad, h_final = pl.pallas_call(
        rnn_agent_rollout_kernel,
        out_shape=(
            jax.ShapeDtypeStruct((T, B, A_pad), jnp.float32),
            jax.ShapeDtypeStruct((B, H), jnp.float32),
        ),
        grid_spec=grid_spec,
        compiler_params=pltpu.CompilerParams(
            dimension_semantics=("arbitrary",)),   # time axis is a carried loop
    )(xs, h0,
      params["w1"], params["b1"],
      params["wi"], params["bi"],
      params["wh"], params["bh"],
      w2p, b2p)

    return q_pad[:, :, :A], h_final


def rnn_agent_forward(inputs, hidden_state, params):
    """Single-step forward — semantics of RNNAgent.forward(inputs, hidden)."""
    H = params["w1"].shape[1]
    h_in = hidden_state.reshape(-1, H)
    q_seq, h = rnn_agent_rollout(inputs[None], h_in, params)
    return q_seq[0], h


def make_params(key, input_shape, hidden_dim, n_actions):
    """Deterministic synthetic parameters (no checkpoint load).

    Weights stored as (in, out); GRU gate weights pre-fused as [r|z|n] along
    the output axis so the kernel does two (H, 3H) matmuls per step.
    """
    ks = jax.random.split(key, 8)
    scale = 0.1

    def w(k, shape):
        return (scale * jax.random.normal(k, shape)).astype(jnp.float32)

    H = hidden_dim
    return {
        "w1": w(ks[0], (input_shape, H)),
        "b1": w(ks[1], (1, H)),
        "wi": w(ks[2], (H, 3 * H)),
        "bi": w(ks[3], (1, 3 * H)),
        "wh": w(ks[4], (H, 3 * H)),
        "bh": w(ks[5], (1, 3 * H)),
        "w2": w(ks[6], (H, n_actions)),
        "b2": w(ks[7], (1, n_actions)),
    }


def cast_weights(params, dtype):
    """Cast matmul weights (not biases) to `dtype` — bf16 for v6e/v7x MXU."""
    out = dict(params)
    for k in ("w1", "wi", "wh", "w2"):
        out[k] = params[k].astype(dtype)
    return out


def rnn_agent_step_reference(x, h, p):
    """Pure-JAX reference mirroring the PyTorch module (one timestep)."""
    xh = jnp.maximum(x @ p["w1"] + p["b1"], 0.0)
    H = h.shape[-1]
    gi = xh @ p["wi"] + p["bi"]
    gh = h @ p["wh"] + p["bh"]
    r = jax.nn.sigmoid(gi[:, :H] + gh[:, :H])
    z = jax.nn.sigmoid(gi[:, H:2 * H] + gh[:, H:2 * H])
    n = jnp.tanh(gi[:, 2 * H:] + r * gh[:, 2 * H:])
    h_new = (1.0 - z) * n + z * h
    q = h_new @ p["w2"] + p["b2"]
    return q, h_new


def rollout_reference(xs, h0, p):
    qs = []
    h = h0
    for t in range(xs.shape[0]):
        q, h = rnn_agent_step_reference(xs[t], h, p)
        qs.append(q)
    return jnp.stack(qs, axis=0), h


if __name__ == "__main__":
    # Small shapes consistent with the module: T timesteps, batch of agents
    # (sublane-aligned), obs dim, rnn_hidden_dim, n_actions.
    T = 8
    B = 8
    INPUT_SHAPE = 48
    HIDDEN = 32
    N_ACTIONS = 8

    key = jax.random.PRNGKey(0)
    k_x, k_h, k_p = jax.random.split(key, 3)

    xs = jax.random.normal(k_x, (T, B, INPUT_SHAPE), dtype=jnp.float32)
    # init_hidden() returns zeros; use nonzero hidden to exercise the GRU path.
    h0 = jax.random.normal(k_h, (B, HIDDEN), dtype=jnp.float32)
    params = make_params(k_p, INPUT_SHAPE, HIDDEN, N_ACTIONS)

    # ---- f32 weights: multi-step rollout, time loop inside the kernel ----
    q_seq, h_final = rnn_agent_rollout(xs, h0, params)
    q_seq = jax.block_until_ready(q_seq)
    h_final = jax.block_until_ready(h_final)

    q_ref_seq, h_ref = rollout_reference(xs, h0, params)
    assert q_seq.shape == (T, B, N_ACTIONS) and h_final.shape == (B, HIDDEN)
    assert jnp.allclose(q_seq, q_ref_seq, atol=1e-5, rtol=1e-5)
    assert jnp.allclose(h_final, h_ref, atol=1e-5, rtol=1e-5)

    # ---- single-step API (exact semantics of RNNAgent.forward) ----
    q1, h1 = rnn_agent_forward(xs[0], h0, params)
    q1 = jax.block_until_ready(q1)
    q1_ref, h1_ref = rnn_agent_step_reference(xs[0], h0, params)
    assert jnp.allclose(q1, q1_ref, atol=1e-5, rtol=1e-5)
    assert jnp.allclose(h1, h1_ref, atol=1e-5, rtol=1e-5)

    # ---- bf16 matmul weights (v6e/v7x MXU-native), f32 gate math ----
    params_bf16 = cast_weights(params, jnp.bfloat16)
    q_bf, h_bf = rnn_agent_rollout(xs, h0, params_bf16)
    q_bf = jax.block_until_ready(q_bf)
    h_bf = jax.block_until_ready(h_bf)
    assert jnp.allclose(q_bf, q_ref_seq, atol=5e-2, rtol=5e-2)
    assert jnp.allclose(h_bf, h_ref, atol=5e-2, rtol=5e-2)

    print("KERNEL_OK")
</pallas_src>

<mosaic_0001>
module attributes {stable_mosaic.version = 11 : i64} {
  func.func @rnn_agent_rollout_kernel(%arg0: i32, %arg1: memref<1x8x48xf32, #tpu.memory_space<vmem>>, %arg2: memref<8x32xf32, #tpu.memory_space<vmem>>, %arg3: memref<48x32xf32, #tpu.memory_space<vmem>>, %arg4: memref<1x32xf32, #tpu.memory_space<vmem>>, %arg5: memref<32x96xf32, #tpu.memory_space<vmem>>, %arg6: memref<1x96xf32, #tpu.memory_space<vmem>>, %arg7: memref<32x96xf32, #tpu.memory_space<vmem>>, %arg8: memref<1x96xf32, #tpu.memory_space<vmem>>, %arg9: memref<32x128xf32, #tpu.memory_space<vmem>>, %arg10: memref<1x128xf32, #tpu.memory_space<vmem>>, %arg11: memref<1x8x128xf32, #tpu.memory_space<vmem>>, %arg12: memref<8x32xf32, #tpu.memory_space<vmem>>, %arg13: memref<8x32xf32, #tpu.memory_space<vmem>>) attributes {dimension_semantics = [#tpu.dimension_semantics<arbitrary>], iteration_bounds = array<i64: 8>, scalar_prefetch = 0 : i64, scratch_operands = 1 : i64, tpu.core_type = #tpu.core_type<tc>, window_params = [{transform_indices = @transform_0, window_bounds = array<i64: 1, 8, 48>}, {pipeline_mode = #tpu.pipeline_mode<synchronous>, transform_indices = @transform_1, window_bounds = array<i64: 8, 32>}, {pipeline_mode = #tpu.pipeline_mode<synchronous>, transform_indices = @transform_2, window_bounds = array<i64: 48, 32>}, {pipeline_mode = #tpu.pipeline_mode<synchronous>, transform_indices = @transform_3, window_bounds = array<i64: 1, 32>}, {pipeline_mode = #tpu.pipeline_mode<synchronous>, transform_indices = @transform_4, window_bounds = array<i64: 32, 96>}, {pipeline_mode = #tpu.pipeline_mode<synchronous>, transform_indices = @transform_5, window_bounds = array<i64: 1, 96>}, {pipeline_mode = #tpu.pipeline_mode<synchronous>, transform_indices = @transform_6, window_bounds = array<i64: 32, 96>}, {pipeline_mode = #tpu.pipeline_mode<synchronous>, transform_indices = @transform_7, window_bounds = array<i64: 1, 96>}, {pipeline_mode = #tpu.pipeline_mode<synchronous>, transform_indices = @transform_8, window_bounds = array<i64: 32, 128>}, {pipeline_mode = #tpu.pipeline_mode<synchronous>, transform_indices = @transform_9, window_bounds = array<i64: 1, 128>}, {transform_indices = @transform_10, window_bounds = array<i64: 1, 8, 128>}, {pipeline_mode = #tpu.pipeline_mode<synchronous>, transform_indices = @transform_11, window_bounds = array<i64: 8, 32>}]} {
    %c0_i32 = arith.constant 0 : i32
    %0 = arith.cmpi eq, %arg0, %c0_i32 : i32
    %1 = arith.extui %0 : i1 to i32
    %c0_i32_0 = arith.constant 0 : i32
    %2 = arith.cmpi ne, %1, %c0_i32_0 : i32
    scf.if %2 {
      %c0_34 = arith.constant 0 : index
      %c0_35 = arith.constant 0 : index
      %61 = vector.load %arg2[%c0_34, %c0_35] : memref<8x32xf32, #tpu.memory_space<vmem>>, vector<8x32xf32>
      %c0_36 = arith.constant 0 : index
      %c0_37 = arith.constant 0 : index
      %62 = vector.load %arg13[%c0_36, %c0_37] : memref<8x32xf32, #tpu.memory_space<vmem>>, vector<8x32xf32>
      tpu.vector_store %arg13[%c0_36, %c0_37], %61 {strides = array<i32>} : memref<8x32xf32, #tpu.memory_space<vmem>>, vector<8x32xf32>,
    } else {
    }
    %c0 = arith.constant 0 : index
    %c0_1 = arith.constant 0 : index
    %3 = vector.load %arg13[%c0, %c0_1] : memref<8x32xf32, #tpu.memory_space<vmem>>, vector<8x32xf32>
    %c0_2 = arith.constant 0 : index
    %c0_3 = arith.constant 0 : index
    %c0_4 = arith.constant 0 : index
    %4 = vector.load %arg1[%c0_2, %c0_3, %c0_4] : memref<1x8x48xf32, #tpu.memory_space<vmem>>, vector<1x8x48xf32>
    %5 = vector.shape_cast %4 : vector<1x8x48xf32> to vector<8x48xf32>
    %c0_5 = arith.constant 0 : index
    %c0_6 = arith.constant 0 : index
    %6 = vector.load %arg3[%c0_5, %c0_6] : memref<48x32xf32, #tpu.memory_space<vmem>>, vector<48x32xf32>
    %cst = arith.constant dense<0.000000e+00> : vector<8x32xf32>
    %7 = tpu.matmul %5, %6, %cst {dimension_numbers = #tpu.dot_dimension_numbers<[1], [0], [0], [1], [0, 0, 1, 1], [], []>} : vector<8x48xf32>, vector<48x32xf32>, vector<8x32xf32> -> vector<8x32xf32>
    %c0_7 = arith.constant 0 : index
    %c0_8 = arith.constant 0 : index
    %8 = vector.load %arg4[%c0_7, %c0_8] : memref<1x32xf32, #tpu.memory_space<vmem>>, vector<1x32xf32>
    %9 = vector.broadcast %8 : vector<1x32xf32> to vector<8x32xf32>
    %10 = arith.addf %7, %9 : vector<8x32xf32>
    %cst_9 = arith.constant 0.000000e+00 : f32
    %11 = vector.broadcast %cst_9 : f32 to vector<8x32xf32>
    %12 = arith.maximumf %10, %11 : vector<8x32xf32>
    %c0_10 = arith.constant 0 : index
    %c0_11 = arith.constant 0 : index
    %13 = vector.load %arg5[%c0_10, %c0_11] : memref<32x96xf32, #tpu.memory_space<vmem>>, vector<32x96xf32>
    %cst_12 = arith.constant dense<0.000000e+00> : vector<8x96xf32>
    %14 = tpu.matmul %12, %13, %cst_12 {dimension_numbers = #tpu.dot_dimension_numbers<[1], [0], [0], [1], [0, 0, 1, 1], [], []>} : vector<8x32xf32>, vector<32x96xf32>, vector<8x96xf32> -> vector<8x96xf32>
    %c0_13 = arith.constant 0 : index
    %c0_14 = arith.constant 0 : index
    %15 = vector.load %arg6[%c0_13, %c0_14] : memref<1x96xf32, #tpu.memory_space<vmem>>, vector<1x96xf32>
    %16 = vector.broadcast %15 : vector<1x96xf32> to vector<8x96xf32>
    %17 = arith.addf %14, %16 : vector<8x96xf32>
    %c0_15 = arith.constant 0 : index
    %c0_16 = arith.constant 0 : index
    %18 = vector.load %arg7[%c0_15, %c0_16] : memref<32x96xf32, #tpu.memory_space<vmem>>, vector<32x96xf32>
    %cst_17 = arith.constant dense<0.000000e+00> : vector<8x96xf32>
    %19 = tpu.matmul %3, %18, %cst_17 {dimension_numbers = #tpu.dot_dimension_numbers<[1], [0], [0], [1], [0, 0, 1, 1], [], []>} : vector<8x32xf32>, vector<32x96xf32>, vector<8x96xf32> -> vector<8x96xf32>
    %c0_18 = arith.constant 0 : index
    %c0_19 = arith.constant 0 : index
    %20 = vector.load %arg8[%c0_18, %c0_19] : memref<1x96xf32, #tpu.memory_space<vmem>>, vector<1x96xf32>
    %21 = vector.broadcast %20 : vector<1x96xf32> to vector<8x96xf32>
    %22 = arith.addf %19, %21 : vector<8x96xf32>
    %23 = vector.extract_strided_slice %17 {offsets = [0, 0], sizes = [8, 32], strides = [1, 1]} : vector<8x96xf32> to vector<8x32xf32>
    %24 = vector.extract_strided_slice %22 {offsets = [0, 0], sizes = [8, 32], strides = [1, 1]} : vector<8x96xf32> to vector<8x32xf32>
    %25 = arith.addf %23, %24 : vector<8x32xf32>
    %26 = arith.negf %25 : vector<8x32xf32>
    %27 = math.exp %26 : vector<8x32xf32>
    %cst_20 = arith.constant 1.000000e+00 : f32
    %28 = vector.broadcast %cst_20 : f32 to vector<8x32xf32>
    %29 = arith.addf %28, %27 : vector<8x32xf32>
    %30 = arith.divf %28, %29 : vector<8x32xf32>
    %31 = vector.extract_strided_slice %17 {offsets = [0, 32], sizes = [8, 32], strides = [1, 1]} : vector<8x96xf32> to vector<8x32xf32>
    %32 = vector.extract_strided_slice %22 {offsets = [0, 32], sizes = [8, 32], strides = [1, 1]} : vector<8x96xf32> to vector<8x32xf32>
    %33 = arith.addf %31, %32 : vector<8x32xf32>
    %34 = arith.negf %33 : vector<8x32xf32>
    %35 = math.exp %34 : vector<8x32xf32>
    %cst_21 = arith.constant 1.000000e+00 : f32
    %36 = vector.broadcast %cst_21 : f32 to vector<8x32xf32>
    %37 = arith.addf %36, %35 : vector<8x32xf32>
    %38 = arith.divf %36, %37 : vector<8x32xf32>
    %39 = vector.extract_strided_slice %17 {offsets = [0, 64], sizes = [8, 32], strides = [1, 1]} : vector<8x96xf32> to vector<8x32xf32>
    %40 = vector.extract_strided_slice %22 {offsets = [0, 64], sizes = [8, 32], strides = [1, 1]} : vector<8x96xf32> to vector<8x32xf32>
    %41 = arith.mulf %30, %40 : vector<8x32xf32>
    %42 = arith.addf %39, %41 : vector<8x32xf32>
    %43 = math.tanh %42 : vector<8x32xf32>
    %cst_22 = arith.constant 1.000000e+00 : f32
    %44 = vector.broadcast %cst_22 : f32 to vector<8x32xf32>
    %45 = arith.subf %44, %38 : vector<8x32xf32>
    %46 = arith.mulf %45, %43 : vector<8x32xf32>
    %47 = arith.mulf %38, %3 : vector<8x32xf32>
    %48 = arith.addf %46, %47 : vector<8x32xf32>
    %c0_23 = arith.constant 0 : index
    %c0_24 = arith.constant 0 : index
    %49 = vector.load %arg9[%c0_23, %c0_24] : memref<32x128xf32, #tpu.memory_space<vmem>>, vector<32x128xf32>
    %cst_25 = arith.constant dense<0.000000e+00> : vector<8x128xf32>
    %50 = tpu.matmul %48, %49, %cst_25 {dimension_numbers = #tpu.dot_dimension_numbers<[1], [0], [0], [1], [0, 0, 1, 1], [], []>} : vector<8x32xf32>, vector<32x128xf32>, vector<8x128xf32> -> vector<8x128xf32>
    %c0_26 = arith.constant 0 : index
    %c0_27 = arith.constant 0 : index
    %51 = vector.load %arg10[%c0_26, %c0_27] : memref<1x128xf32, #tpu.memory_space<vmem>>, vector<1x128xf32>
    %52 = vector.broadcast %51 : vector<1x128xf32> to vector<8x128xf32>
    %53 = arith.addf %50, %52 : vector<8x128xf32>
    %c0_28 = arith.constant 0 : index
    %c0_29 = arith.constant 0 : index
    %c0_30 = arith.constant 0 : index
    %54 = vector.load %arg11[%c0_28, %c0_29, %c0_30] : memref<1x8x128xf32, #tpu.memory_space<vmem>>, vector<1x8x128xf32>
    %55 = vector.shape_cast %54 : vector<1x8x128xf32> to vector<8x128xf32>
    %56 = vector.shape_cast %53 : vector<8x128xf32> to vector<1x8x128xf32>
    tpu.vector_store %arg11[%c0_28, %c0_29, %c0_30], %56 {strides = array<i32>} : memref<1x8x128xf32, #tpu.memory_space<vmem>>, vector<1x8x128xf32>,
    %c0_31 = arith.constant 0 : index
    %c0_32 = arith.constant 0 : index
    %57 = vector.load %arg13[%c0_31, %c0_32] : memref<8x32xf32, #tpu.memory_space<vmem>>, vector<8x32xf32>
    tpu.vector_store %arg13[%c0_31, %c0_32], %48 {strides = array<i32>} : memref<8x32xf32, #tpu.memory_space<vmem>>, vector<8x32xf32>,
    %c7_i32 = arith.constant 7 : i32
    %58 = arith.cmpi eq, %arg0, %c7_i32 : i32
    %59 = arith.extui %58 : i1 to i32
    %c0_i32_33 = arith.constant 0 : i32
    %60 = arith.cmpi ne, %59, %c0_i32_33 : i32
    scf.if %60 {
      %c0_34 = arith.constant 0 : index
      %c0_35 = arith.constant 0 : index
      %61 = vector.load %arg12[%c0_34, %c0_35] : memref<8x32xf32, #tpu.memory_space<vmem>>, vector<8x32xf32>
      tpu.vector_store %arg12[%c0_34, %c0_35], %48 {strides = array<i32>} : memref<8x32xf32, #tpu.memory_space<vmem>>, vector<8x32xf32>,
    } else {
    }
    return
  }
  func.func @transform_0(%arg0: i32) -> (i32, i32, i32) {
    %c0_i32 = arith.constant 0 : i32
    %c0_i32_0 = arith.constant 0 : i32
    %c0_i32_1 = arith.constant 0 : i32
    return %arg0, %c0_i32, %c0_i32_0 : i32, i32, i32
  }
  func.func @transform_1(%arg0: i32) -> (i32, i32) {
    %c0_i32 = arith.constant 0 : i32
    %c0_i32_0 = arith.constant 0 : i32
    %c0_i32_1 = arith.constant 0 : i32
    return %c0_i32, %c0_i32_0 : i32, i32
  }
  func.func @transform_2(%arg0: i32) -> (i32, i32) {
    %c0_i32 = arith.constant 0 : i32
    %c0_i32_0 = arith.constant 0 : i32
    %c0_i32_1 = arith.constant 0 : i32
    return %c0_i32, %c0_i32_0 : i32, i32
  }
  func.func @transform_3(%arg0: i32) -> (i32, i32) {
    %c0_i32 = arith.constant 0 : i32
    %c0_i32_0 = arith.constant 0 : i32
    %c0_i32_1 = arith.constant 0 : i32
    return %c0_i32, %c0_i32_0 : i32, i32
  }
  func.func @transform_4(%arg0: i32) -> (i32, i32) {
    %c0_i32 = arith.constant 0 : i32
    %c0_i32_0 = arith.constant 0 : i32
    %c0_i32_1 = arith.constant 0 : i32
    return %c0_i32, %c0_i32_0 : i32, i32
  }
  func.func @transform_5(%arg0: i32) -> (i32, i32) {
    %c0_i32 = arith.constant 0 : i32
    %c0_i32_0 = arith.constant 0 : i32
    %c0_i32_1 = arith.constant 0 : i32
    return %c0_i32, %c0_i32_0 : i32, i32
  }
  func.func @transform_6(%arg0: i32) -> (i32, i32) {
    %c0_i32 = arith.constant 0 : i32
    %c0_i32_0 = arith.constant 0 : i32
    %c0_i32_1 = arith.constant 0 : i32
    return %c0_i32, %c0_i32_0 : i32, i32
  }
  func.func @transform_7(%arg0: i32) -> (i32, i32) {
    %c0_i32 = arith.constant 0 : i32
    %c0_i32_0 = arith.constant 0 : i32
    %c0_i32_1 = arith.constant 0 : i32
    return %c0_i32, %c0_i32_0 : i32, i32
  }
  func.func @transform_8(%arg0: i32) -> (i32, i32) {
    %c0_i32 = arith.constant 0 : i32
    %c0_i32_0 = arith.constant 0 : i32
    %c0_i32_1 = arith.constant 0 : i32
    return %c0_i32, %c0_i32_0 : i32, i32
  }
  func.func @transform_9(%arg0: i32) -> (i32, i32) {
    %c0_i32 = arith.constant 0 : i32
    %c0_i32_0 = arith.constant 0 : i32
    %c0_i32_1 = arith.constant 0 : i32
    return %c0_i32, %c0_i32_0 : i32, i32
  }
  func.func @transform_10(%arg0: i32) -> (i32, i32, i32) {
    %c0_i32 = arith.constant 0 : i32
    %c0_i32_0 = arith.constant 0 : i32
    %c0_i32_1 = arith.constant 0 : i32
    return %arg0, %c0_i32, %c0_i32_0 : i32, i32, i32
  }
  func.func @transform_11(%arg0: i32) -> (i32, i32) {
    %c0_i32 = arith.constant 0 : i32
    %c0_i32_0 = arith.constant 0 : i32
    %c0_i32_1 = arith.constant 0 : i32
    return %c0_i32, %c0_i32_0 : i32, i32
  }
}

</mosaic_0001>

<llo_original>
// kernel: tpu_custom_call.1
$region0: #{tpu_custom_call.1}
  #allocation0 [shape = 'u32[]', space=smem, size = 0x4, offset = 0x4, fixed_abs, tag = 'smem constant byte address 0x4 - core index']
  #allocation1 [shape = 'u32[144,128]{1,0:T(1,128)}', space=vmem, size = 0x12000, scoped, tag = 'internal scratch']
  #allocation2 [shape = 'f32[8,32]{1,0:T(8,128)}', space=vmem, size = 0x1000, scoped, tag = 'scratch operand']
  %s0 = inlined_call_operand.vmem [shape: f32[8,8,48], index: 0, kind: input, shape index: {}]
  %s1 = inlined_call_operand.vmem [shape: f32[8,32], index: 1, kind: input, shape index: {}]
  %s2 = inlined_call_operand.vmem [shape: f32[48,32], index: 2, kind: input, shape index: {}]
  %s3 = inlined_call_operand.vmem [shape: f32[1,32], index: 3, kind: input, shape index: {}]
  %s4 = inlined_call_operand.hbm [shape: f32[32,96], index: 4, kind: input, shape index: {}]
  %s5 = inlined_call_operand.vmem [shape: f32[1,96], index: 5, kind: input, shape index: {}]
  %s6 = inlined_call_operand.hbm [shape: f32[32,96], index: 6, kind: input, shape index: {}]
  %s7 = inlined_call_operand.vmem [shape: f32[1,96], index: 7, kind: input, shape index: {}]
  %s8 = inlined_call_operand.hbm [shape: f32[32,128], index: 8, kind: input, shape index: {}]
  %s9 = inlined_call_operand.vmem [shape: f32[1,128], index: 9, kind: input, shape index: {}]
  %s10 = inlined_call_operand.hbm [shape: f32[8,8,128], index: 10, kind: output, shape index: {0}]
  %s11 = inlined_call_operand.hbm [shape: f32[8,32], index: 11, kind: output, shape index: {1}]
  %12 = xla_tuple %s10, %s11
  %s13 = sld [smem:[#allocation0]]
  $region101: #{tpu_custom_call.1} parent=0
    _
  %s15 = ssub.s32 1, %s13
  %s16 = scalar_select 0, %s15, %s13
  $region1: #{tpu_custom_call.1} parent=0
    #allocation3 [shape = 'u8[16384]{0}', space=vmem, size = 0x4000, scoped, tag = 'input window, operand 4, single buffered']
    #allocation4 [shape = 's32[2]{0}', space=sflag, size = 0x8, scoped, tag = 'scoped memory for tpu_custom_call.1']
    #allocation5 [shape = 's32[2]{0}', space=sflag, size = 0x8, scoped, tag = 'scoped memory for tpu_custom_call.1']
    #allocation6 [shape = 'u8[16384]{0}', space=vmem, size = 0x4000, scoped, tag = 'input window, operand 6, single buffered']
    #allocation7 [shape = 's32[1]{0}', space=sflag, size = 0x4, scoped, tag = 'scoped memory for tpu_custom_call.1']
    #allocation8 [shape = 'u8[16384]{0}', space=vmem, size = 0x4000, scoped, tag = 'input window, operand 8, single buffered']
    #allocation9 [shape = 'u8[8192]{0}', space=vmem, size = 0x2000, scoped, tag = 'output window, operand 0']
    #allocation10 [shape = 'u8[4096]{0}', space=vmem, size = 0x1000, scoped, tag = 'output window, operand 1, single buffered']
    #allocation11 [shape = 's32[1]{0}', space=sflag, size = 0x4, scoped, tag = 'scoped memory for tpu_custom_call.1']
    %17 = vsyncpa [#allocation4], 0
    %18 = vsyncpa [#allocation7], 0
    %19 = vsyncpa [#allocation5], 0
    %s20 = scalar_lea.sflag [#allocation5], 1
    %21 = vsyncpa %s20, 0
    %22 = vsyncpa [#allocation11], 0
    loop: start=0, step=1, limit=10
    $region2: #{tpu_custom_call.1} parent=1 // loop_pre_header
      _
    $region3: #{tpu_custom_call.1} parent=1 // loop_header
      %s24 = sphi 0, %s28
      %p25 = scmp.ge.s32.totalorder %s24, 10
      %s34 = sphi 0, %s36
      %s37 = sphi 0, %s34
      %s38 = sphi 0, %s37
      %s54 = sphi 0, %s38
      %s58 = sphi 0, %s58
      %s60 = sphi 0, %s58
      %s61 = sphi 0, %s60
      %s75 = sphi 0, %s61
      %s79 = sphi 0, %s79
      %s81 = sphi 0, %s79
      %s82 = sphi 0, %s81
      %s96 = sphi 0, %s82
      %s100 = sphi 0, %s100
      %s102 = sphi 0, %s100
      %s103 = sphi 0, %s102
      %s117 = sphi 0, %s103
      %s121 = sphi 0, %s121
      %s123 = sphi 0, %s121
      %s124 = sphi 0, %s123
      %s138 = sphi 0, %s124
      %s142 = sphi 0, %s142
      %s144 = sphi 0, %s142
      %s145 = sphi 0, %s144
      %s159 = sphi 0, %s145
      %s163 = sphi 0, %s163
      %s165 = sphi 0, %s163
      %s166 = sphi 0, %s165
      %s180 = sphi 0, %s166
      %s184 = sphi 0, %s184
      %s186 = sphi 0, %s184
      %s187 = sphi 0, %s186
      %s201 = sphi 0, %s187
      %s205 = sphi 0, %s205
      %s207 = sphi 0, %s205
      %s208 = sphi 0, %s207
      %s222 = sphi 0, %s208
      %s226 = sphi 0, %s226
      %s228 = sphi 0, %s226
      %s229 = sphi 0, %s228
      %s243 = sphi 0, %s229
      %s249 = sphi 0, %s251
      %s252 = sphi 0, %s249
      %s253 = sphi 0, %s252
      %s269 = sphi 0, %s253
      %s273 = sphi 0, %s273
      %s275 = sphi 0, %s273
      %s276 = sphi 0, %s275
      %s290 = sphi 0, %s276
    $region4: #{tpu_custom_call.1} parent=1 // loop_header_branch
      %27 = sbr.rel (%p25) target = $region8
    $region5: #{tpu_custom_call.1} parent=1 // loop_body
      %s29 = ssub.s32 %s24, 1
      %s30 = ssub.s32 %s24, 2
      %s31 = sadd.s32 %s24, 1
      %s32 = ssub.s32 %s24, %s31
      %p33 = scmp.eq.s32.totalorder %s32, 0
      %s35 = sadd.s32 %s34, 1
      %s36 = scalar_select %p33, %s34, %s35
      %p39 = pneg %p33
      %p40 = scmp.eq.s32.totalorder %s24, 7
      %p41 = por %p39, %p40
      %p42 = scmp.ne.s32.totalorder %s34, %s37
      %p43 = scmp.eq.s32.totalorder %s24, 0
      %p44 = por %p42, %p43
      %p45 = scmp.ne.s32.totalorder %s34, %s37
      %p46 = scmp.eq.s32.totalorder %s29, 7
      %p47 = por %p45, %p46
      %p48 = scmp.ne.s32.totalorder %s37, %s38
      %p49 = scmp.eq.s32.totalorder %s29, 0
      %p50 = por %p48, %p49
      %p51 = scmp.ne.s32.totalorder %s37, %s38
      %p52 = scmp.eq.s32.totalorder %s30, 7
      %p53 = por %p51, %p52
      %p55 = scmp.ne.s32.totalorder %s38, %s54
      %p56 = scmp.eq.s32.totalorder %s30, 0
      %p57 = por %p55, %p56
      %s59 = sadd.s32 %s58, 1
      %p62 = scmp.eq.s32.totalorder %s24, 7
      %p63 = scmp.ne.s32.totalorder %s58, %s60
      %p64 = scmp.eq.s32.totalorder %s24, 0
      %p65 = por %p63, %p64
      %p66 = scmp.ne.s32.totalorder %s58, %s60
      %p67 = scmp.eq.s32.totalorder %s29, 7
      %p68 = por %p66, %p67
      %p69 = scmp.ne.s32.totalorder %s60, %s61
      %p70 = scmp.eq.s32.totalorder %s29, 0
      %p71 = por %p69, %p70
      %p72 = scmp.ne.s32.totalorder %s60, %s61
      %p73 = scmp.eq.s32.totalorder %s30, 7
      %p74 = por %p72, %p73
      %p76 = scmp.ne.s32.totalorder %s61, %s75
      %p77 = scmp.eq.s32.totalorder %s30, 0
      %p78 = por %p76, %p77
      %s80 = sadd.s32 %s79, 1
      %p83 = scmp.eq.s32.totalorder %s24, 7
      %p84 = scmp.ne.s32.totalorder %s79, %s81
      %p85 = scmp.eq.s32.totalorder %s24, 0
      %p86 = por %p84, %p85
      %p87 = scmp.ne.s32.totalorder %s79, %s81
      %p88 = scmp.eq.s32.totalorder %s29, 7
      %p89 = por %p87, %p88
      %p90 = scmp.ne.s32.totalorder %s81, %s82
      %p91 = scmp.eq.s32.totalorder %s29, 0
      %p92 = por %p90, %p91
      %p93 = scmp.ne.s32.totalorder %s81, %s82
      %p94 = scmp.eq.s32.totalorder %s30, 7
      %p95 = por %p93, %p94
      %p97 = scmp.ne.s32.totalorder %s82, %s96
      %p98 = scmp.eq.s32.totalorder %s30, 0
      %p99 = por %p97, %p98
      %s101 = sadd.s32 %s100, 1
      %p104 = scmp.eq.s32.totalorder %s24, 7
      %p105 = scmp.ne.s32.totalorder %s100, %s102
      %p106 = scmp.eq.s32.totalorder %s24, 0
      %p107 = por %p105, %p106
      %p108 = scmp.ne.s32.totalorder %s100, %s102
      %p109 = scmp.eq.s32.totalorder %s29, 7
      %p110 = por %p108, %p109
      %p111 = scmp.ne.s32.totalorder %s102, %s103
      %p112 = scmp.eq.s32.totalorder %s29, 0
      %p113 = por %p111, %p112
      %p114 = scmp.ne.s32.totalorder %s102, %s103
      %p115 = scmp.eq.s32.totalorder %s30, 7
      %p116 = por %p114, %p115
      %p118 = scmp.ne.s32.totalorder %s103, %s117
      %p119 = scmp.eq.s32.totalorder %s30, 0
      %p120 = por %p118, %p119
      %s122 = sadd.s32 %s121, 1
      %p125 = scmp.eq.s32.totalorder %s24, 7
      %p126 = scmp.ne.s32.totalorder %s121, %s123
      %p127 = scmp.eq.s32.totalorder %s24, 0
      %p128 = por %p126, %p127
      %p129 = scmp.ne.s32.totalorder %s121, %s123
      %p130 = scmp.eq.s32.totalorder %s29, 7
      %p131 = por %p129, %p130
      %p132 = scmp.ne.s32.totalorder %s123, %s124
      %p133 = scmp.eq.s32.totalorder %s29, 0
      %p134 = por %p132, %p133
      %p135 = scmp.ne.s32.totalorder %s123, %s124
      %p136 = scmp.eq.s32.totalorder %s30, 7
      %p137 = por %p135, %p136
      %p139 = scmp.ne.s32.totalorder %s124, %s138
      %p140 = scmp.eq.s32.totalorder %s30, 0
      %p141 = por %p139, %p140
      %s143 = sadd.s32 %s142, 1
      %p146 = scmp.eq.s32.totalorder %s24, 7
      %p147 = scmp.ne.s32.totalorder %s142, %s144
      %p148 = scmp.eq.s32.totalorder %s24, 0
      %p149 = por %p147, %p148
      %p150 = scmp.ne.s32.totalorder %s142, %s144
      %p151 = scmp.eq.s32.totalorder %s29, 7
      %p152 = por %p150, %p151
      %p153 = scmp.ne.s32.totalorder %s144, %s145
      %p154 = scmp.eq.s32.totalorder %s29, 0
      %p155 = por %p153, %p154
      %p156 = scmp.ne.s32.totalorder %s144, %s145
      %p157 = scmp.eq.s32.totalorder %s30, 7
      %p158 = por %p156, %p157
      %p160 = scmp.ne.s32.totalorder %s145, %s159
      %p161 = scmp.eq.s32.totalorder %s30, 0
      %p162 = por %p160, %p161
      %s164 = sadd.s32 %s163, 1
      %p167 = scmp.eq.s32.totalorder %s24, 7
      %p168 = scmp.ne.s32.totalorder %s163, %s165
      %p169 = scmp.eq.s32.totalorder %s24, 0
      %p170 = por %p168, %p169
      %p171 = scmp.ne.s32.totalorder %s163, %s165
      %p172 = scmp.eq.s32.totalorder %s29, 7
      %p173 = por %p171, %p172
      %p174 = scmp.ne.s32.totalorder %s165, %s166
      %p175 = scmp.eq.s32.totalorder %s29, 0
      %p176 = por %p174, %p175
      %p177 = scmp.ne.s32.totalorder %s165, %s166
      %p178 = scmp.eq.s32.totalorder %s30, 7
      %p179 = por %p177, %p178
      %p181 = scmp.ne.s32.totalorder %s166, %s180
      %p182 = scmp.eq.s32.totalorder %s30, 0
      %p183 = por %p181, %p182
      %s185 = sadd.s32 %s184, 1
      %p188 = scmp.eq.s32.totalorder %s24, 7
      %p189 = scmp.ne.s32.totalorder %s184, %s186
      %p190 = scmp.eq.s32.totalorder %s24, 0
      %p191 = por %p189, %p190
      %p192 = scmp.ne.s32.totalorder %s184, %s186
      %p193 = scmp.eq.s32.totalorder %s29, 7
      %p194 = por %p192, %p193
      %p195 = scmp.ne.s32.totalorder %s186, %s187
      %p196 = scmp.eq.s32.totalorder %s29, 0
      %p197 = por %p195, %p196
      %p198 = scmp.ne.s32.totalorder %s186, %s187
      %p199 = scmp.eq.s32.totalorder %s30, 7
      %p200 = por %p198, %p199
      %p202 = scmp.ne.s32.totalorder %s187, %s201
      %p203 = scmp.eq.s32.totalorder %s30, 0
      %p204 = por %p202, %p203
      %s206 = sadd.s32 %s205, 1
      %p209 = scmp.eq.s32.totalorder %s24, 7
      %p210 = scmp.ne.s32.totalorder %s205, %s207
      %p211 = scmp.eq.s32.totalorder %s24, 0
      %p212 = por %p210, %p211
      %p213 = scmp.ne.s32.totalorder %s205, %s207
      %p214 = scmp.eq.s32.totalorder %s29, 7
      %p215 = por %p213, %p214
      %p216 = scmp.ne.s32.totalorder %s207, %s208
      %p217 = scmp.eq.s32.totalorder %s29, 0
      %p218 = por %p216, %p217
      %p219 = scmp.ne.s32.totalorder %s207, %s208
      %p220 = scmp.eq.s32.totalorder %s30, 7
      %p221 = por %p219, %p220
      %p223 = scmp.ne.s32.totalorder %s208, %s222
      %p224 = scmp.eq.s32.totalorder %s30, 0
      %p225 = por %p223, %p224
      %s227 = sadd.s32 %s226, 1
      %p230 = scmp.eq.s32.totalorder %s24, 7
      %p231 = scmp.ne.s32.totalorder %s226, %s228
      %p232 = scmp.eq.s32.totalorder %s24, 0
      %p233 = por %p231, %p232
      %p234 = scmp.ne.s32.totalorder %s226, %s228
      %p235 = scmp.eq.s32.totalorder %s29, 7
      %p236 = por %p234, %p235
      %p237 = scmp.ne.s32.totalorder %s228, %s229
      %p238 = scmp.eq.s32.totalorder %s29, 0
      %p239 = por %p237, %p238
      %p240 = scmp.ne.s32.totalorder %s228, %s229
      %p241 = scmp.eq.s32.totalorder %s30, 7
      %p242 = por %p240, %p241
      %p244 = scmp.ne.s32.totalorder %s229, %s243
      %p245 = scmp.eq.s32.totalorder %s30, 0
      %p246 = por %p244, %p245
      %s247 = ssub.s32 %s24, %s31
      %p248 = scmp.eq.s32.totalorder %s247, 0
      %s250 = sadd.s32 %s249, 1
      %s251 = scalar_select %p248, %s249, %s250
      %p254 = pneg %p248
      %p255 = scmp.eq.s32.totalorder %s24, 7
      %p256 = por %p254, %p255
      %p257 = scmp.ne.s32.totalorder %s249, %s252
      %p258 = scmp.eq.s32.totalorder %s24, 0
      %p259 = por %p257, %p258
      %p260 = scmp.ne.s32.totalorder %s249, %s252
      %p261 = scmp.eq.s32.totalorder %s29, 7
      %p262 = por %p260, %p261
      %p263 = scmp.ne.s32.totalorder %s252, %s253
      %p264 = scmp.eq.s32.totalorder %s29, 0
      %p265 = por %p263, %p264
      %p266 = scmp.ne.s32.totalorder %s252, %s253
      %p267 = scmp.eq.s32.totalorder %s30, 7
      %p268 = por %p266, %p267
      %p270 = scmp.ne.s32.totalorder %s253, %s269
      %p271 = scmp.eq.s32.totalorder %s30, 0
      %p272 = por %p270, %p271
      %s274 = sadd.s32 %s273, 1
      %p277 = scmp.eq.s32.totalorder %s24, 7
      %p278 = scmp.ne.s32.totalorder %s273, %s275
      %p279 = scmp.eq.s32.totalorder %s24, 0
      %p280 = por %p278, %p279
      %p281 = scmp.ne.s32.totalorder %s273, %s275
      %p282 = scmp.eq.s32.totalorder %s29, 7
      %p283 = por %p281, %p282
      %p284 = scmp.ne.s32.totalorder %s275, %s276
      %p285 = scmp.eq.s32.totalorder %s29, 0
      %p286 = por %p284, %p285
      %p287 = scmp.ne.s32.totalorder %s275, %s276
      %p288 = scmp.eq.s32.totalorder %s30, 7
      %p289 = por %p287, %p288
      %p291 = scmp.ne.s32.totalorder %s276, %s290
      %p292 = scmp.eq.s32.totalorder %s30, 0
      %p293 = por %p291, %p292
      %p294 = scmp.le.s32.totalorder 1, %s24
      %p295 = scmp.lt.s32.totalorder %s24, 9
      %p296 = pnand %p294, %p295
      %p297 = pneg %p296
      // Predicated region
      $region9: #{tpu_custom_call.1} parent=5 // pred_check
        _
      $region10: #{tpu_custom_call.1} parent=5 // pred_check_branch
        %299 = sbr.rel (%p296) target = $region12
      $region11: #{tpu_custom_call.1} parent=5 // pred_region
        %s300 = ssub.s32 %s24, 1
        // Predicated region
        $region13: #{tpu_custom_call.1} parent=11 // pred_check
          %p301 = pneg %p71
        $region14: #{tpu_custom_call.1} parent=11 // pred_check_branch
          %303 = sbr.rel (%p301) target = $region16
        $region15: #{tpu_custom_call.1} parent=11 // pred_region
          _
        $region16: #{tpu_custom_call.1} parent=11 // pred_fallthru
          _
        // Predicated region
        $region17: #{tpu_custom_call.1} parent=11 // pred_check
          %p304 = pneg %p92
        $region18: #{tpu_custom_call.1} parent=11 // pred_check_branch
          %306 = sbr.rel (%p304) target = $region20
        $region19: #{tpu_custom_call.1} parent=11 // pred_region
          _
        $region20: #{tpu_custom_call.1} parent=11 // pred_fallthru
          _
        // Predicated region
        $region21: #{tpu_custom_call.1} parent=11 // pred_check
          %p307 = pneg %p113
        $region22: #{tpu_custom_call.1} parent=11 // pred_check_branch
          %309 = sbr.rel (%p307) target = $region24
        $region23: #{tpu_custom_call.1} parent=11 // pred_region
          _
        $region24: #{tpu_custom_call.1} parent=11 // pred_fallthru
          _
        // Predicated region
        $region25: #{tpu_custom_call.1} parent=11 // pred_check
          %p310 = pneg %p134
        $region26: #{tpu_custom_call.1} parent=11 // pred_check_branch
          %312 = sbr.rel (%p310) target = $region28
        $region27: #{tpu_custom_call.1} parent=11 // pred_region
          %s314 = ssub.s32 512, 512
          %315 = vsyncadd [#allocation4], %s314
          %s316 = sshll.u32 [#allocation3], 4
          %s317 = int_to_ptr.vmem [resolvable:$true] %s316
          %322 = dma.hbm_to_vmem [thread:$0]  %s4, 512, %s317, [#allocation4], 128, 128, 8
        $region28: #{tpu_custom_call.1} parent=11 // pred_fallthru
          _
        // Predicated region
        $region29: #{tpu_custom_call.1} parent=11 // pred_check
          %p323 = pneg %p155
        $region30: #{tpu_custom_call.1} parent=11 // pred_check_branch
          %325 = sbr.rel (%p323) target = $region32
        $region31: #{tpu_custom_call.1} parent=11 // pred_region
          _
        $region32: #{tpu_custom_call.1} parent=11 // pred_fallthru
          _
        // Predicated region
        $region33: #{tpu_custom_call.1} parent=11 // pred_check
          %p326 = pneg %p176
        $region34: #{tpu_custom_call.1} parent=11 // pred_check_branch
          %328 = sbr.rel (%p326) target = $region36
        $region35: #{tpu_custom_call.1} parent=11 // pred_region
          %s330 = ssub.s32 512, 512
          %331 = vsyncadd [#allocation7], %s330
          %s332 = sshll.u32 [#allocation6], 4
          %s333 = int_to_ptr.vmem [resolvable:$true] %s332
          %338 = dma.hbm_to_vmem [thread:$0]  %s6, 512, %s333, [#allocation7], 128, 128, 8
        $region36: #{tpu_custom_call.1} parent=11 // pred_fallthru
          _
        // Predicated region
        $region37: #{tpu_custom_call.1} parent=11 // pred_check
          %p339 = pneg %p197
        $region38: #{tpu_custom_call.1} parent=11 // pred_check_branch
          %341 = sbr.rel (%p339) target = $region40
        $region39: #{tpu_custom_call.1} parent=11 // pred_region
          _
        $region40: #{tpu_custom_call.1} parent=11 // pred_fallthru
          _
        // Predicated region
        $region41: #{tpu_custom_call.1} parent=11 // pred_check
          %p342 = pneg %p218
        $region42: #{tpu_custom_call.1} parent=11 // pred_check_branch
          %344 = sbr.rel (%p342) target = $region44
        $region43: #{tpu_custom_call.1} parent=11 // pred_region
          %s346 = ssub.s32 512, 512
          %347 = vsyncadd [#allocation7], %s346
          %s348 = sshll.u32 [#allocation8], 4
          %s349 = int_to_ptr.vmem [resolvable:$true] %s348
          %354 = dma.hbm_to_vmem [thread:$0]  %s8, 512, %s349, [#allocation7], 128, 128, 8
        $region44: #{tpu_custom_call.1} parent=11 // pred_fallthru
          _
        // Predicated region
        $region45: #{tpu_custom_call.1} parent=11 // pred_check
          %p355 = pneg %p239
        $region46: #{tpu_custom_call.1} parent=11 // pred_check_branch
          %357 = sbr.rel (%p355) target = $region48
        $region47: #{tpu_custom_call.1} parent=11 // pred_region
          _
        $region48: #{tpu_custom_call.1} parent=11 // pred_fallthru
          _
      $region12: #{tpu_custom_call.1} parent=5 // pred_fallthru
        _
      %p358 = scmp.lt.s32.totalorder %s24, 8
      // Predicated region
      $region49: #{tpu_custom_call.1} parent=5 // pred_check
        %p359 = pneg %p358
      $region50: #{tpu_custom_call.1} parent=5 // pred_check_branch
        %361 = sbr.rel (%p359) target = $region52
      $region51: #{tpu_custom_call.1} parent=5 // pred_region
        // Predicated region
        $region53: #{tpu_custom_call.1} parent=51 // pred_check
          %p362 = pneg %p44
        $region54: #{tpu_custom_call.1} parent=51 // pred_check_branch
          %364 = sbr.rel (%p362) target = $region56
        $region55: #{tpu_custom_call.1} parent=51 // pred_region
          %p365 = scmp.lt.s32.totalorder %s24, 7
          %s366 = scalar_select %p365, %s24, 7
          %s367 = smul.addr %s366, 8
          %s368 = scalar_lea.vmem %s0, %s367
        $region56: #{tpu_custom_call.1} parent=51 // pred_fallthru
          _
      $region52: #{tpu_custom_call.1} parent=5 // pred_fallthru
        _
      %p369 = scmp.le.s32.totalorder 1, %s24
      %p370 = scmp.lt.s32.totalorder %s24, 9
      %p371 = pnand %p369, %p370
      %p372 = pneg %p371
      // Predicated region
      $region57: #{tpu_custom_call.1} parent=5 // pred_check
        _
      $region58: #{tpu_custom_call.1} parent=5 // pred_check_branch
        %374 = sbr.rel (%p371) target = $region60
      $region59: #{tpu_custom_call.1} parent=5 // pred_region
        %s375 = ssub.s32 %s24, 1
        // Predicated region
        $region61: #{tpu_custom_call.1} parent=59 // pred_check
          %p376 = pneg %p134
        $region62: #{tpu_custom_call.1} parent=59 // pred_check_branch
          %378 = sbr.rel (%p376) target = $region64
        $region63: #{tpu_custom_call.1} parent=59 // pred_region
          %379 = dma.done [#allocation4], 512
        $region64: #{tpu_custom_call.1} parent=59 // pred_fallthru
          _
        // Predicated region
        $region65: #{tpu_custom_call.1} parent=59 // pred_check
          %p380 = pneg %p176
        $region66: #{tpu_custom_call.1} parent=59 // pred_check_branch
          %382 = sbr.rel (%p380) target = $region68
        $region67: #{tpu_custom_call.1} parent=59 // pred_region
          %383 = dma.done [#allocation7], 512
        $region68: #{tpu_custom_call.1} parent=59 // pred_fallthru
          _
        // Predicated region
        $region69: #{tpu_custom_call.1} parent=59 // pred_check
          %p384 = pneg %p218
        $region70: #{tpu_custom_call.1} parent=59 // pred_check_branch
          %386 = sbr.rel (%p384) target = $region72
        $region71: #{tpu_custom_call.1} parent=59 // pred_region
          %387 = dma.done [#allocation7], 512
        $region72: #{tpu_custom_call.1} parent=59 // pred_fallthru
          _
        %p388 = scmp.lt.s32.totalorder %s29, 7
        %s389 = scalar_select %p388, %s29, 7
        %s390 = smul.addr %s389, 8
        %s391 = scalar_lea.vmem %s0, %s390
        %p392 = pneg %p50
        %p393 = pneg %p47
        %p394 = pneg %p71
        %p395 = pneg %p68
        %p396 = pneg %p92
        %p397 = pneg %p89
        %p398 = pneg %p113
        %p399 = pneg %p110
        %p400 = pneg %p134
        %p401 = pneg %p131
        %p402 = pneg %p155
        %p403 = pneg %p152
        %p404 = pneg %p176
        %p405 = pneg %p173
        %p406 = pneg %p197
        %p407 = pneg %p194
        %p408 = pneg %p218
        %p409 = pneg %p215
        %p410 = pneg %p239
        %p411 = pneg %p236
        %p412 = pneg %p265
        %p413 = pneg %p262
        %s414 = sand.u32 %s252, 1
        %s415 = scalar_lea.sflag [#allocation5], %s414
        %s416 = sand.u32 %s252, 1
        %s417 = smul.addr %s416, 8
        %s418 = scalar_lea.vmem [#allocation9], %s417
        %p419 = pneg %p286
        %p420 = pneg %p283
        %p421 = scmp.lt.s32.totalorder %s29, 7
        %s422 = scalar_select %p421, %s29, 7
        %s423 = smul.addr %s422, 8
        %s424 = scalar_lea.vmem %s0, %s423
        %p425 = scmp.eq.s32.totalorder %s29, 0
        // Predicated region
        $region73: #{tpu_custom_call.1} parent=59 // pred_check
          %p426 = pneg %p425
        $region74: #{tpu_custom_call.1} parent=59 // pred_check_branch
          %428 = sbr.rel (%p426) target = $region76
        $region75: #{tpu_custom_call.1} parent=59 // pred_region
          %v429 = vld [vmem:[%s1] sm:$0xff]
          %vm430 = vcmask 261120
          %431 = vst.msk [vmem:[#allocation2] sm:$0xff] %vm430, %v429
        $region76: #{tpu_custom_call.1} parent=59 // pred_fallthru
          _
        %v432 = vld [vmem:[#allocation2] sm:$0xff]
        %v433 = vld [vmem:[%s424] sm:$0xff]
        %v434 = vld [vmem:[%s2] sm:$0xff]
        %v435 = vld [vmem:[%s2 + $0x8] sm:$0xff]
        %v436 = vld [vmem:[%s2 + $0x10] sm:$0xff]
        %v437 = vld [vmem:[%s2 + $0x18] sm:$0xff]
        %v438 = vld [vmem:[%s2 + $0x20] sm:$0xff]
        %v439 = vld [vmem:[%s2 + $0x28] sm:$0xff]
        %v440 = vld [vmem:[%s3] sm:$0x1]
        %v442 = vlaneseq
        %v443 = vshrl.u32 %v442, 7
        %v444 = vsub.s32 0, %v443
        %v445 = vrot.slane %v440, %v444
        %vm447 = vcmask 392192
        %v449 = vsel %vm447, %v433, 0
        %451 = vmatprep.subr.mxu0 0.0
        %452 = vmatpush1.msra.mxu0 0.0
        %453 = vmatprep.subr.mxu0 0.0
        %454 = vmatpush1.msra.mxu0 0.0
        %455 = vmatprep.subr.mxu0 0.0
        %456 = vmatpush1.msra.mxu0 0.0
        %457 = vmatprep.subr.mxu0 0.0
        %458 = vmatpush1.msra.mxu0 0.0
        %459 = vmatprep.subr.mxu0 0.0
        %460 = vmatpush1.msra.mxu0 0.0
        %461 = vmatprep.subr.mxu0 0.0
        %462 = vmatpush1.msra.mxu0 0.0
        %463 = vmatprep.subr.mxu0 0.0
        %464 = vmatpush1.msra.mxu0 0.0
        %465 = vmatprep.subr.mxu0 0.0
        %466 = vmatpush1.msra.mxu0 0.0
        %467 = vmatprep.subr.mxu0 0.0
        %468 = vmatpush1.msra.mxu0 0.0
        %469 = vmatprep.subr.mxu0 0.0
        %470 = vmatpush1.msra.mxu0 0.0
        %471 = vmatprep.subr.mxu0 0.0
        %472 = vmatpush1.msra.mxu0 %v439
        %473 = vmatprep.subr.mxu0 0.0
        %474 = vmatpush1.msra.mxu0 %v438
        %475 = vmatprep.subr.mxu0 0.0
        %476 = vmatpush1.msra.mxu0 %v437
        %477 = vmatprep.subr.mxu0 0.0
        %478 = vmatpush1.msra.mxu0 %v436
        %479 = vmatprep.subr.mxu0 0.0
        %480 = vmatpush1.msra.mxu0 %v435
        %481 = vmatprep.subr.mxu0 0.0
        %482 = vmatpush1.msra.mxu0 %v434
        %483 = vmatprep.subr.mxu0 0.0
        %484 = vmatpush2.msra.mxu0 0.0
        %485 = vmatprep.subr.mxu0 0.0
        %486 = vmatpush2.msra.mxu0 0.0
        %487 = vmatprep.subr.mxu0 0.0
        %488 = vmatpush2.msra.mxu0 0.0
        %489 = vmatprep.subr.mxu0 0.0
        %490 = vmatpush2.msra.mxu0 0.0
        %491 = vmatprep.subr.mxu0 0.0
        %492 = vmatpush2.msra.mxu0 0.0
        %493 = vmatprep.subr.mxu0 0.0
        %494 = vmatpush2.msra.mxu0 0.0
        %495 = vmatprep.subr.mxu0 0.0
        %496 = vmatpush2.msra.mxu0 0.0
        %497 = vmatprep.subr.mxu0 0.0
        %498 = vmatpush2.msra.mxu0 0.0
        %499 = vmatprep.subr.mxu0 0.0
        %500 = vmatpush2.msra.mxu0 0.0
        %501 = vmatprep.subr.mxu0 0.0
        %502 = vmatpush2.msra.mxu0 0.0
        %503 = vmatprep.subr.mxu0 0.0
        %504 = vmatpush2.msra.mxu0 0.0
        %505 = vmatprep.subr.mxu0 0.0
        %506 = vmatpush2.msra.mxu0 0.0
        %507 = vmatprep.subr.mxu0 0.0
        %508 = vmatpush2.msra.mxu0 0.0
        %509 = vmatprep.subr.mxu0 0.0
        %510 = vmatpush2.msra.mxu0 0.0
        %511 = vmatprep.subr.mxu0 0.0
        %512 = vmatpush2.msra.mxu0 0.0
        %513 = vmatprep.subr.mxu0 0.0
        %514 = vmatpush2.msra.mxu0 0.0
        %515 = vmatprep.mubr.f32.mxu0 0.0
        %516 = vmatmul.mubr.f32.gmra.mxu0 %v449
        %v517 = vpop.f32.mrf.mxu0
        %v518 = vadd.f32 %v445, %v517
        %v519 = vpop.f32.mrf.mxu0
        %520 = vdwg.mxu0
        %v521 = vmax.f32 %v518, 0.0
        %v522 = vld [vmem:[#allocation3] sm:$0xff]
        %v523 = vld [vmem:[#allocation3 + $0x8] sm:$0xff]
        %v524 = vld [vmem:[#allocation3 + $0x10] sm:$0xff]
        %v525 = vld [vmem:[#allocation3 + $0x18] sm:$0xff]
        %v526 = vld [vmem:[%s5] sm:$0x1]
        %v528 = vlaneseq
        %v529 = vshrl.u32 %v528, 7
        %v530 = vsub.s32 0, %v529
        %v531 = vrot.slane %v526, %v530
        %vm533 = vcmask 261120
        %v535 = vsel %vm533, %v521, 0
        %537 = vmatprep.subr.mxu0 0.0
        %538 = vmatpush1.msra.mxu0 0.0
        %539 = vmatprep.subr.mxu0 0.0
        %540 = vmatpush1.msra.mxu0 0.0
        %541 = vmatprep.subr.mxu0 0.0
        %542 = vmatpush1.msra.mxu0 0.0
        %543 = vmatprep.subr.mxu0 0.0
        %544 = vmatpush1.msra.mxu0 0.0
        %545 = vmatprep.subr.mxu0 0.0
        %546 = vmatpush1.msra.mxu0 0.0
        %547 = vmatprep.subr.mxu0 0.0
        %548 = vmatpush1.msra.mxu0 0.0
        %549 = vmatprep.subr.mxu0 0.0
        %550 = vmatpush1.msra.mxu0 0.0
        %551 = vmatprep.subr.mxu0 0.0
        %552 = vmatpush1.msra.mxu0 0.0
        %553 = vmatprep.subr.mxu0 0.0
        %554 = vmatpush1.msra.mxu0 0.0
        %555 = vmatprep.subr.mxu0 0.0
        %556 = vmatpush1.msra.mxu0 0.0
        %557 = vmatprep.subr.mxu0 0.0
        %558 = vmatpush1.msra.mxu0 0.0
        %559 = vmatprep.subr.mxu0 0.0
        %560 = vmatpush1.msra.mxu0 0.0
        %561 = vmatprep.subr.mxu0 0.0
        %562 = vmatpush1.msra.mxu0 %v525
        %563 = vmatprep.subr.mxu0 0.0
        %564 = vmatpush1.msra.mxu0 %v524
        %565 = vmatprep.subr.mxu0 0.0
        %566 = vmatpush1.msra.mxu0 %v523
        %567 = vmatprep.subr.mxu0 0.0
        %568 = vmatpush1.msra.mxu0 %v522
        %569 = vmatprep.subr.mxu0 0.0
        %570 = vmatpush2.msra.mxu0 0.0
        %571 = vmatprep.subr.mxu0 0.0
        %572 = vmatpush2.msra.mxu0 0.0
        %573 = vmatprep.subr.mxu0 0.0
        %574 = vmatpush2.msra.mxu0 0.0
        %575 = vmatprep.subr.mxu0 0.0
        %576 = vmatpush2.msra.mxu0 0.0
        %577 = vmatprep.subr.mxu0 0.0
        %578 = vmatpush2.msra.mxu0 0.0
        %579 = vmatprep.subr.mxu0 0.0
        %580 = vmatpush2.msra.mxu0 0.0
        %581 = vmatprep.subr.mxu0 0.0
        %582 = vmatpush2.msra.mxu0 0.0
        %583 = vmatprep.subr.mxu0 0.0
        %584 = vmatpush2.msra.mxu0 0.0
        %585 = vmatprep.subr.mxu0 0.0
        %586 = vmatpush2.msra.mxu0 0.0
        %587 = vmatprep.subr.mxu0 0.0
        %588 = vmatpush2.msra.mxu0 0.0
        %589 = vmatprep.subr.mxu0 0.0
        %590 = vmatpush2.msra.mxu0 0.0
        %591 = vmatprep.subr.mxu0 0.0
        %592 = vmatpush2.msra.mxu0 0.0
        %593 = vmatprep.subr.mxu0 0.0
        %594 = vmatpush2.msra.mxu0 0.0
        %595 = vmatprep.subr.mxu0 0.0
        %596 = vmatpush2.msra.mxu0 0.0
        %597 = vmatprep.subr.mxu0 0.0
        %598 = vmatpush2.msra.mxu0 0.0
        %599 = vmatprep.subr.mxu0 0.0
        %600 = vmatpush2.msra.mxu0 0.0
        %601 = vmatprep.mubr.f32.mxu0 0.0
        %602 = vmatmul.mubr.f32.gmra.mxu0 %v535
        %v603 = vpop.f32.mrf.mxu0
        %v604 = vadd.f32 %v531, %v603
        %v605 = vpop.f32.mrf.mxu0
        %606 = vdwg.mxu0
        %v607 = vld [vmem:[#allocation6] sm:$0xff]
        %v608 = vld [vmem:[#allocation6 + $0x8] sm:$0xff]
        %v609 = vld [vmem:[#allocation6 + $0x10] sm:$0xff]
        %v610 = vld [vmem:[#allocation6 + $0x18] sm:$0xff]
        %v611 = vld [vmem:[%s7] sm:$0x1]
        %v613 = vlaneseq
        %v614 = vshrl.u32 %v613, 7
        %v615 = vsub.s32 0, %v614
        %v616 = vrot.slane %v611, %v615
        %v619 = vsel %vm533, %v432, 0
        %621 = vmatprep.subr.mxu0 0.0
        %622 = vmatpush1.msra.mxu0 0.0
        %623 = vmatprep.subr.mxu0 0.0
        %624 = vmatpush1.msra.mxu0 0.0
        %625 = vmatprep.subr.mxu0 0.0
        %626 = vmatpush1.msra.mxu0 0.0
        %627 = vmatprep.subr.mxu0 0.0
        %628 = vmatpush1.msra.mxu0 0.0
        %629 = vmatprep.subr.mxu0 0.0
        %630 = vmatpush1.msra.mxu0 0.0
        %631 = vmatprep.subr.mxu0 0.0
        %632 = vmatpush1.msra.mxu0 0.0
        %633 = vmatprep.subr.mxu0 0.0
        %634 = vmatpush1.msra.mxu0 0.0
        %635 = vmatprep.subr.mxu0 0.0
        %636 = vmatpush1.msra.mxu0 0.0
        %637 = vmatprep.subr.mxu0 0.0
        %638 = vmatpush1.msra.mxu0 0.0
        %639 = vmatprep.subr.mxu0 0.0
        %640 = vmatpush1.msra.mxu0 0.0
        %641 = vmatprep.subr.mxu0 0.0
        %642 = vmatpush1.msra.mxu0 0.0
        %643 = vmatprep.subr.mxu0 0.0
        %644 = vmatpush1.msra.mxu0 0.0
        %645 = vmatprep.subr.mxu0 0.0
        %646 = vmatpush1.msra.mxu0 %v610
        %647 = vmatprep.subr.mxu0 0.0
        %648 = vmatpush1.msra.mxu0 %v609
        %649 = vmatprep.subr.mxu0 0.0
        %650 = vmatpush1.msra.mxu0 %v608
        %651 = vmatprep.subr.mxu0 0.0
        %652 = vmatpush1.msra.mxu0 %v607
        %653 = vmatprep.subr.mxu0 0.0
        %654 = vmatpush2.msra.mxu0 0.0
        %655 = vmatprep.subr.mxu0 0.0
        %656 = vmatpush2.msra.mxu0 0.0
        %657 = vmatprep.subr.mxu0 0.0
        %658 = vmatpush2.msra.mxu0 0.0
        %659 = vmatprep.subr.mxu0 0.0
        %660 = vmatpush2.msra.mxu0 0.0
        %661 = vmatprep.subr.mxu0 0.0
        %662 = vmatpush2.msra.mxu0 0.0
        %663 = vmatprep.subr.mxu0 0.0
        %664 = vmatpush2.msra.mxu0 0.0
        %665 = vmatprep.subr.mxu0 0.0
        %666 = vmatpush2.msra.mxu0 0.0
        %667 = vmatprep.subr.mxu0 0.0
        %668 = vmatpush2.msra.mxu0 0.0
        %669 = vmatprep.subr.mxu0 0.0
        %670 = vmatpush2.msra.mxu0 0.0
        %671 = vmatprep.subr.mxu0 0.0
        %672 = vmatpush2.msra.mxu0 0.0
        %673 = vmatprep.subr.mxu0 0.0
        %674 = vmatpush2.msra.mxu0 0.0
        %675 = vmatprep.subr.mxu0 0.0
        %676 = vmatpush2.msra.mxu0 0.0
        %677 = vmatprep.subr.mxu0 0.0
        %678 = vmatpush2.msra.mxu0 0.0
        %679 = vmatprep.subr.mxu0 0.0
        %680 = vmatpush2.msra.mxu0 0.0
        %681 = vmatprep.subr.mxu0 0.0
        %682 = vmatpush2.msra.mxu0 0.0
        %683 = vmatprep.subr.mxu0 0.0
        %684 = vmatpush2.msra.mxu0 0.0
        %685 = vmatprep.mubr.f32.mxu0 0.0
        %686 = vmatmul.mubr.f32.gmra.mxu0 %v619
        %v687 = vpop.f32.mrf.mxu0
        %v688 = vadd.f32 %v616, %v687
        %v689 = vpop.f32.mrf.mxu0
        %690 = vdwg.mxu0
        %v691 = vadd.f32 %v604, %v688
        %v692 = vxor.u32 %v691, 2147483648
        %v693 = vmul.f32 %v692, 1.442695
        %v694 = vpow.pop %v693
        %v695 = vadd.f32 %v694, 1.0
        %v696 = vrcp.pop %v695
        %v697 = vmul.f32 1.0, %v696
        %699 = vrot.lane.b32.xlu0 %v688, 64
        %v700 = vpop.permute.xlu0 %699
        %v702 = vmul.f32 %v697, %v700
        %704 = vrot.lane.b32.xlu0 %v702, 64
        %v705 = vpop.permute.xlu0 %704
        %v707 = vadd.f32 %v604, %v705
        %v708 = vtanh.pop %v707
        %v709 = vsub.f32 1.0, %v697
        %711 = vrot.lane.b32.xlu0 %v708, 96
        %v712 = vpop.permute.xlu0 %711
        %v714 = vmul.f32 %v709, %v712
        %715 = vrot.lane.b32.xlu0 %v432, 32
        %v716 = vpop.permute.xlu0 %715
        %v718 = vmul.f32 %v697, %v716
        %v719 = vadd.f32 %v714, %v718
        %v720 = vld [vmem:[#allocation8] sm:$0xff]
        %v721 = vld [vmem:[#allocation8 + $0x8] sm:$0xff]
        %v722 = vld [vmem:[#allocation8 + $0x10] sm:$0xff]
        %v723 = vld [vmem:[#allocation8 + $0x18] sm:$0xff]
        %v724 = vld [vmem:[%s9] sm:$0x1]
        %v726 = vlaneseq
        %v727 = vshrl.u32 %v726, 7
        %v728 = vsub.s32 0, %v727
        %v729 = vrot.slane %v724, %v728
        %732 = vrot.lane.b32.xlu0 %v719, 96
        %v733 = vpop.permute.xlu0 %732
        %v734 = vsel %vm533, %v733, 0
        %736 = vmatprep.subr.mxu0 0.0
        %737 = vmatpush1.msra.mxu0 0.0
        %738 = vmatprep.subr.mxu0 0.0
        %739 = vmatpush1.msra.mxu0 0.0
        %740 = vmatprep.subr.mxu0 0.0
        %741 = vmatpush1.msra.mxu0 0.0
        %742 = vmatprep.subr.mxu0 0.0
        %743 = vmatpush1.msra.mxu0 0.0
        %744 = vmatprep.subr.mxu0 0.0
        %745 = vmatpush1.msra.mxu0 0.0
        %746 = vmatprep.subr.mxu0 0.0
        %747 = vmatpush1.msra.mxu0 0.0
        %748 = vmatprep.subr.mxu0 0.0
        %749 = vmatpush1.msra.mxu0 0.0
        %750 = vmatprep.subr.mxu0 0.0
        %751 = vmatpush1.msra.mxu0 0.0
        %752 = vmatprep.subr.mxu0 0.0
        %753 = vmatpush1.msra.mxu0 0.0
        %754 = vmatprep.subr.mxu0 0.0
        %755 = vmatpush1.msra.mxu0 0.0
        %756 = vmatprep.subr.mxu0 0.0
        %757 = vmatpush1.msra.mxu0 0.0
        %758 = vmatprep.subr.mxu0 0.0
        %759 = vmatpush1.msra.mxu0 0.0
        %760 = vmatprep.subr.mxu0 0.0
        %761 = vmatpush1.msra.mxu0 %v723
        %762 = vmatprep.subr.mxu0 0.0
        %763 = vmatpush1.msra.mxu0 %v722
        %764 = vmatprep.subr.mxu0 0.0
        %765 = vmatpush1.msra.mxu0 %v721
        %766 = vmatprep.subr.mxu0 0.0
        %767 = vmatpush1.msra.mxu0 %v720
        %768 = vmatprep.subr.mxu0 0.0
        %769 = vmatpush2.msra.mxu0 0.0
        %770 = vmatprep.subr.mxu0 0.0
        %771 = vmatpush2.msra.mxu0 0.0
        %772 = vmatprep.subr.mxu0 0.0
        %773 = vmatpush2.msra.mxu0 0.0
        %774 = vmatprep.subr.mxu0 0.0
        %775 = vmatpush2.msra.mxu0 0.0
        %776 = vmatprep.subr.mxu0 0.0
        %777 = vmatpush2.msra.mxu0 0.0
        %778 = vmatprep.subr.mxu0 0.0
        %779 = vmatpush2.msra.mxu0 0.0
        %780 = vmatprep.subr.mxu0 0.0
        %781 = vmatpush2.msra.mxu0 0.0
        %782 = vmatprep.subr.mxu0 0.0
        %783 = vmatpush2.msra.mxu0 0.0
        %784 = vmatprep.subr.mxu0 0.0
        %785 = vmatpush2.msra.mxu0 0.0
        %786 = vmatprep.subr.mxu0 0.0
        %787 = vmatpush2.msra.mxu0 0.0
        %788 = vmatprep.subr.mxu0 0.0
        %789 = vmatpush2.msra.mxu0 0.0
        %790 = vmatprep.subr.mxu0 0.0
        %791 = vmatpush2.msra.mxu0 0.0
        %792 = vmatprep.subr.mxu0 0.0
        %793 = vmatpush2.msra.mxu0 0.0
        %794 = vmatprep.subr.mxu0 0.0
        %795 = vmatpush2.msra.mxu0 0.0
        %796 = vmatprep.subr.mxu0 0.0
        %797 = vmatpush2.msra.mxu0 0.0
        %798 = vmatprep.subr.mxu0 0.0
        %799 = vmatpush2.msra.mxu0 0.0
        %800 = vmatprep.mubr.f32.mxu0 0.0
        %801 = vmatmul.mubr.f32.gmra.mxu0 %v734
        %v802 = vpop.f32.mrf.mxu0
        %v803 = vadd.f32 %v729, %v802
        %v804 = vpop.f32.mrf.mxu0
        %805 = vdwg.mxu0
        %806 = vst [vmem:[%s418] sm:$0xff] %v803
        %808 = vst.msk [vmem:[#allocation2] sm:$0xff] %vm533, %v733
        %p809 = scmp.eq.s32.totalorder %s29, 7
        // Predicated region
        $region77: #{tpu_custom_call.1} parent=59 // pred_check
          %p810 = pneg %p809
        $region78: #{tpu_custom_call.1} parent=59 // pred_check_branch
          %812 = sbr.rel (%p810) target = $region80
        $region79: #{tpu_custom_call.1} parent=59 // pred_region
          %813 = vst.msk [vmem:[#allocation10] sm:$0xff] %vm533, %v733
        $region80: #{tpu_custom_call.1} parent=59 // pred_fallthru
          _
        %s814 = sand.u32 %s252, 1
        %s815 = scalar_lea.sflag [#allocation5], %s814
        %s816 = sand.u32 %s252, 1
        %s817 = smul.addr %s816, 8
        %s818 = scalar_lea.vmem [#allocation9], %s817
        // Predicated region
        $region81: #{tpu_custom_call.1} parent=59 // pred_check
          %p819 = pneg %p262
        $region82: #{tpu_custom_call.1} parent=59 // pred_check_branch
          %821 = sbr.rel (%p819) target = $region84
        $region83: #{tpu_custom_call.1} parent=59 // pred_region
          %s823 = ssub.s32 128, 128
          %824 = vsyncadd %s815, %s823
          %s825 = smul.addr %s29, 128
          %s826 = scalar_lea.hbm %s10, %s825
          %s828 = sshll.u32 %s818, 4
          %s829 = int_to_ptr.vmem [resolvable:$true] %s828
          %831 = dma.vmem_to_hbm [thread:$0]  %s829, 128, %s826, %s815
        $region84: #{tpu_custom_call.1} parent=59 // pred_fallthru
          _
        // Predicated region
        $region85: #{tpu_custom_call.1} parent=59 // pred_check
          %p832 = pneg %p283
        $region86: #{tpu_custom_call.1} parent=59 // pred_check_branch
          %834 = sbr.rel (%p832) target = $region88
        $region87: #{tpu_custom_call.1} parent=59 // pred_region
          %s836 = ssub.s32 128, 128
          %837 = vsyncadd [#allocation11], %s836
          %s839 = sshll.u32 [#allocation10], 4
          %s840 = int_to_ptr.vmem [resolvable:$true] %s839
          %842 = dma.vmem_to_hbm [thread:$0]  %s840, 128, %s11, [#allocation11]
        $region88: #{tpu_custom_call.1} parent=59 // pred_fallthru
          _
        // Predicated region
        $region89: #{tpu_custom_call.1} parent=59 // pred_check
          %p843 = pneg %p283
        $region90: #{tpu_custom_call.1} parent=59 // pred_check_branch
          %845 = sbr.rel (%p843) target = $region92
        $region91: #{tpu_custom_call.1} parent=59 // pred_region
          %846 = dma.done [#allocation11], 128
        $region92: #{tpu_custom_call.1} parent=59 // pred_fallthru
          _
      $region60: #{tpu_custom_call.1} parent=5 // pred_fallthru
        _
      %p847 = scmp.le.s32.totalorder 2, %s24
      // Predicated region
      $region93: #{tpu_custom_call.1} parent=5 // pred_check
        %p848 = pneg %p847
      $region94: #{tpu_custom_call.1} parent=5 // pred_check_branch
        %850 = sbr.rel (%p848) target = $region96
      $region95: #{tpu_custom_call.1} parent=5 // pred_region
        %s851 = ssub.s32 %s24, 2
        // Predicated region
        $region97: #{tpu_custom_call.1} parent=95 // pred_check
          %p852 = pneg %p268
        $region98: #{tpu_custom_call.1} parent=95 // pred_check_branch
          %854 = sbr.rel (%p852) target = $region100
        $region99: #{tpu_custom_call.1} parent=95 // pred_region
          %s855 = sand.u32 %s253, 1
          %s856 = scalar_lea.sflag [#allocation5], %s855
          %s857 = sand.u32 %s253, 1
          %s858 = smul.addr %s857, 8
          %s859 = scalar_lea.vmem [#allocation9], %s858
          %860 = dma.done %s856, 128
        $region100: #{tpu_custom_call.1} parent=95 // pred_fallthru
          _
      $region96: #{tpu_custom_call.1} parent=5 // pred_fallthru
        _
    $region6: #{tpu_custom_call.1} parent=1 // loop_footer
      %s28 = sadd.s32 1, %s24
    $region7: #{tpu_custom_call.1} parent=1 // loop_footer_branch
      %23 = sbr.rel target = $region3
    $region8: #{tpu_custom_call.1} parent=1 // loop_exit
      _
    %861 = vsyncpa [#allocation4], 1
    %s862 = scalar_lea.sflag [#allocation4], 1
    %863 = vsyncpa %s862, 1
    %864 = vsyncpa [#allocation7], 1
    %865 = vsyncpa [#allocation5], 1
    %s866 = scalar_lea.sflag [#allocation5], 1
    %867 = vsyncpa %s866, 1
    %868 = vsyncpa [#allocation11], 1

</llo_original>
